<compile_context>
chip_gen: v5e
topology: v5e:2x2
jax: 0.10.0
libtpu: 0.0.40
codegen_flags: <defaults>
</compile_context>

<pallas_src>
import jax
import jax.numpy as jnp
from jax.experimental import pallas as pl
from jax.experimental.pallas import tpu as pltpu

_LANE = 128
_SUBLANE = 8
_CHUNK = _LANE * _SUBLANE  # 1024 elements = one (8,128) f32 slab unit


def _mish_kernel(x_ref, o_ref):
    x = x_ref[...].astype(jnp.float32)
    # tanh(softplus(x)) = (t^2 + 2t) / (t^2 + 2t + 2)  with  t = exp(x).
    # Clamp the exp argument at 20: for x >= 20 the ratio is 1.0 to f32 precision,
    # and the clamp prevents exp overflow (which would give inf/inf = NaN).
    t = jnp.exp(jnp.minimum(x, 20.0))
    u = t * (t + 2.0)                        # t^2 + 2t
    den = u + 2.0                            # t^2 + 2t + 2   (>= 2, no overflow)
    inv = pl.reciprocal(den, approx=True)    # EUP slot (cheap)
    # Two Newton-Raphson refinements on the VPU -> full f32 accuracy of 1/den.
    inv = inv * (2.0 - den * inv)
    inv = inv * (2.0 - den * inv)
    o_ref[...] = (x * (u * inv)).astype(o_ref.dtype)


def mish(x: jax.Array, *, target_tile_bytes: int = 2 * 1024 * 1024) -> jax.Array:
    """Elementwise Mish; accepts any shape / float dtype (matches PyTorch)."""
    orig_shape = x.shape
    dtype = x.dtype
    n = x.size
    if n == 0:
        return x

    flat = x.reshape(-1)
    if n % _CHUNK == 0:
        # Fast path: already (8,128)-aligned -> no pad, no slice (saves HBM passes).
        rows = n // _LANE
        slab = flat
        padded = False
    else:
        total = (-(-n // _CHUNK)) * _CHUNK
        slab = jnp.pad(flat, (0, total - n))
        rows = total // _LANE
        padded = True
    x2d = slab.reshape(rows, _LANE)

    # ~2 MiB per buffer: 4096 rows for f32, 8192 for bf16.  With input + output
    # double-buffered this is 4 x 2 MiB = 8 MiB of VMEM -> fits every generation's
    # scoped-VMEM default (v5e 16 MiB, v6e/v7x 32 MiB), no vmem_limit override needed.
    itemsize = x.dtype.itemsize
    block_rows = (target_tile_bytes // (_LANE * itemsize)) // _SUBLANE * _SUBLANE
    block_rows = max(_SUBLANE, min(block_rows, rows))  # rows is a multiple of 8
    grid = (pl.cdiv(rows, block_rows),)                # ragged last block is fine

    out2d = pl.pallas_call(
        _mish_kernel,
        out_shape=jax.ShapeDtypeStruct((rows, _LANE), dtype),
        grid_spec=pltpu.PrefetchScalarGridSpec(
            num_scalar_prefetch=0,
            grid=grid,
            in_specs=[pl.BlockSpec((block_rows, _LANE), lambda i: (i, 0))],
            out_specs=pl.BlockSpec((block_rows, _LANE), lambda i: (i, 0)),
        ),
        compiler_params=pltpu.CompilerParams(
            dimension_semantics=("parallel",)),  # shards across the 2 TCs on v7x
    )(x2d)

    if padded:
        return out2d.reshape(-1)[:n].reshape(orig_shape)
    return out2d.reshape(orig_shape)


if __name__ == "__main__":
    key = jax.random.PRNGKey(0)
    x = jax.random.normal(key, (2, 4, 16, 16), dtype=jnp.float32)  # NCHW

    y = mish(x)
    jax.block_until_ready(y)

    # Reference in plain JAX.
    ref = x * jnp.tanh(jax.nn.softplus(x))
    assert y.shape == x.shape and y.dtype == x.dtype
    err = jnp.max(jnp.abs(y - ref) / (1.0 + jnp.abs(ref)))
    assert err < 1e-5, f"mismatch vs reference: {err}"

    # Large-magnitude values exercise the exp-clamp path.
    x_big = 30.0 * jax.random.normal(jax.random.PRNGKey(1), (2, 4, 16, 16), jnp.float32)
    y_big = mish(x_big)
    ref_big = x_big * jnp.tanh(jax.nn.softplus(x_big))
    err_big = jnp.max(jnp.abs(y_big - ref_big) / (1.0 + jnp.abs(ref_big)))
    assert err_big < 1e-5, f"mismatch (large values): {err_big}"

    # Ragged size exercises the pad/slice path (numel not a multiple of 1024).
    x_rag = jax.random.normal(jax.random.PRNGKey(2), (3, 5, 7), dtype=jnp.float32)
    y_rag = mish(x_rag)
    ref_rag = x_rag * jnp.tanh(jax.nn.softplus(x_rag))
    err_rag = jnp.max(jnp.abs(y_rag - ref_rag) / (1.0 + jnp.abs(ref_rag)))
    assert y_rag.shape == x_rag.shape and err_rag < 1e-5, f"mismatch (ragged): {err_rag}"

    jax.block_until_ready((y, y_big, y_rag))
    print("KERNEL_OK")
</pallas_src>

<mosaic_0001>
module attributes {stable_mosaic.version = 11 : i64} {
  func.func @_mish_kernel(%arg0: i32, %arg1: memref<16x128xf32, #tpu.memory_space<vmem>>, %arg2: memref<16x128xf32, #tpu.memory_space<vmem>>) attributes {dimension_semantics = [#tpu.dimension_semantics<parallel>], iteration_bounds = array<i64: 1>, scalar_prefetch = 0 : i64, scratch_operands = 0 : i64, tpu.core_type = #tpu.core_type<tc>, window_params = [{transform_indices = @transform_0, window_bounds = array<i64: 16, 128>}, {transform_indices = @transform_1, window_bounds = array<i64: 16, 128>}]} {
    %c0 = arith.constant 0 : index
    %c0_0 = arith.constant 0 : index
    %0 = vector.load %arg1[%c0, %c0_0] : memref<16x128xf32, #tpu.memory_space<vmem>>, vector<16x128xf32>
    %cst = arith.constant 2.000000e+01 : f32
    %1 = vector.broadcast %cst : f32 to vector<16x128xf32>
    %2 = arith.minimumf %0, %1 : vector<16x128xf32>
    %3 = math.exp %2 : vector<16x128xf32>
    %cst_1 = arith.constant 2.000000e+00 : f32
    %4 = vector.broadcast %cst_1 : f32 to vector<16x128xf32>
    %5 = arith.addf %3, %4 : vector<16x128xf32>
    %6 = arith.mulf %3, %5 : vector<16x128xf32>
    %cst_2 = arith.constant 2.000000e+00 : f32
    %7 = vector.broadcast %cst_2 : f32 to vector<16x128xf32>
    %8 = arith.addf %6, %7 : vector<16x128xf32>
    %9 = tpu.reciprocal %8 {approx = true} : vector<16x128xf32> -> vector<16x128xf32>
    %10 = arith.mulf %8, %9 : vector<16x128xf32>
    %cst_3 = arith.constant 2.000000e+00 : f32
    %11 = vector.broadcast %cst_3 : f32 to vector<16x128xf32>
    %12 = arith.subf %11, %10 : vector<16x128xf32>
    %13 = arith.mulf %9, %12 : vector<16x128xf32>
    %14 = arith.mulf %8, %13 : vector<16x128xf32>
    %cst_4 = arith.constant 2.000000e+00 : f32
    %15 = vector.broadcast %cst_4 : f32 to vector<16x128xf32>
    %16 = arith.subf %15, %14 : vector<16x128xf32>
    %17 = arith.mulf %13, %16 : vector<16x128xf32>
    %18 = arith.mulf %6, %17 : vector<16x128xf32>
    %19 = arith.mulf %0, %18 : vector<16x128xf32>
    %c0_5 = arith.constant 0 : index
    %c0_6 = arith.constant 0 : index
    %20 = vector.load %arg2[%c0_5, %c0_6] : memref<16x128xf32, #tpu.memory_space<vmem>>, vector<16x128xf32>
    tpu.vector_store %arg2[%c0_5, %c0_6], %19 {strides = array<i32>} : memref<16x128xf32, #tpu.memory_space<vmem>>, vector<16x128xf32>,
    return
  }
  func.func @transform_0(%arg0: i32) -> (i32, i32) {
    %c0_i32 = arith.constant 0 : i32
    %c0_i32_0 = arith.constant 0 : i32
    return %arg0, %c0_i32 : i32, i32
  }
  func.func @transform_1(%arg0: i32) -> (i32, i32) {
    %c0_i32 = arith.constant 0 : i32
    %c0_i32_0 = arith.constant 0 : i32
    return %arg0, %c0_i32 : i32, i32
  }
}

</mosaic_0001>

<llo_original>
// kernel: tpu_custom_call.1
$region0: #{tpu_custom_call.1}
  #allocation0 [shape = 'u32[]', space=smem, size = 0x4, offset = 0x4, fixed_abs, tag = 'smem constant byte address 0x4 - core index']
  #allocation1 [shape = 'u32[72,128]{1,0:T(1,128)}', space=vmem, size = 0x9000, scoped, tag = 'internal scratch']
  %s0 = inlined_call_operand.hbm [shape: f32[16,128], index: 0, kind: input, shape index: {}]
  %s1 = inlined_call_operand.hbm [shape: f32[16,128], index: 1, kind: output, shape index: {}]
  %s2 = sld [smem:[#allocation0]]
  $region18: #{tpu_custom_call.1} parent=0
    _
  %s4 = ssub.s32 1, %s2
  %s5 = scalar_select 0, %s4, %s2
  $region1: #{tpu_custom_call.1} parent=0
    #allocation2 [shape = 'u8[8192]{0}', space=vmem, size = 0x2000, scoped, tag = 'input window, operand 0, single buffered']
    #allocation3 [shape = 's32[1]{0}', space=sflag, size = 0x4, scoped, tag = 'scoped memory for tpu_custom_call.1']
    #allocation4 [shape = 's32[1]{0}', space=sflag, size = 0x4, scoped, tag = 'scoped memory for tpu_custom_call.1']
    #allocation5 [shape = 'u8[8192]{0}', space=vmem, size = 0x2000, scoped, tag = 'output window, operand 0, single buffered']
    %6 = vsyncpa [#allocation3], 0
    %7 = vsyncpa [#allocation4], 0
    // Predicated region
    $region2: #{tpu_custom_call.1} parent=1 // pred_check
      _
    $region3: #{tpu_custom_call.1} parent=1 // pred_check_branch
      %9 = sbr.rel (0) target = $region5
    $region4: #{tpu_custom_call.1} parent=1 // pred_region
      %11 = vsyncadd [#allocation3], 0
      %s12 = sshll.u32 %s0, 4
      %s13 = int_to_ptr.hbm [resolvable:$true] %s12
      %s14 = sshll.u32 [#allocation2], 4
      %s15 = int_to_ptr.vmem [resolvable:$true] %s14
      %20 = dma.hbm_to_vmem [thread:$0]  %s13, 256, %s15, [#allocation3], 128, 128, 8
    $region5: #{tpu_custom_call.1} parent=1 // pred_fallthru
      _
    // Predicated region
    $region6: #{tpu_custom_call.1} parent=1 // pred_check
      _
    $region7: #{tpu_custom_call.1} parent=1 // pred_check_branch
      %22 = sbr.rel (0) target = $region9
    $region8: #{tpu_custom_call.1} parent=1 // pred_region
      %24 = dma.done [#allocation3], 256
    $region9: #{tpu_custom_call.1} parent=1 // pred_fallthru
      _
    %v25 = vld [vmem:[#allocation2] sm:$0xff]
    %v26 = vld [vmem:[#allocation2 + $0x8] sm:$0xff]
    %v27 = vmin.f32 %v25, 20.0
    %v28 = vmin.f32 %v26, 20.0
    %v29 = vmul.f32 %v27, 1.442695
    %v30 = vpow.pop %v29
    %v31 = vmul.f32 %v28, 1.442695
    %v32 = vpow.pop %v31
    %v33 = vadd.f32 %v30, 2.0
    %v34 = vadd.f32 %v32, 2.0
    %v35 = vmul.f32 %v30, %v33
    %v36 = vmul.f32 %v32, %v34
    %v37 = vadd.f32 %v35, 2.0
    %v38 = vadd.f32 %v36, 2.0
    %v39 = vrcp.pop %v37
    %v40 = vrcp.pop %v38
    %v41 = vmul.f32 %v37, %v39
    %v42 = vmul.f32 %v38, %v40
    %v43 = vsub.f32 2.0, %v41
    %v44 = vsub.f32 2.0, %v42
    %v45 = vmul.f32 %v39, %v43
    %v46 = vmul.f32 %v40, %v44
    %v47 = vmul.f32 %v37, %v45
    %v48 = vmul.f32 %v38, %v46
    %v49 = vsub.f32 2.0, %v47
    %v50 = vsub.f32 2.0, %v48
    %v51 = vmul.f32 %v45, %v49
    %v52 = vmul.f32 %v46, %v50
    %v53 = vmul.f32 %v35, %v51
    %v54 = vmul.f32 %v36, %v52
    %v55 = vmul.f32 %v25, %v53
    %v56 = vmul.f32 %v26, %v54
    %57 = vst [vmem:[#allocation5] sm:$0xff] %v55
    %58 = vst [vmem:[#allocation5 + $0x8] sm:$0xff] %v56
    // Predicated region
    $region10: #{tpu_custom_call.1} parent=1 // pred_check
      _
    $region11: #{tpu_custom_call.1} parent=1 // pred_check_branch
      %60 = sbr.rel (0) target = $region13
    $region12: #{tpu_custom_call.1} parent=1 // pred_region
      %62 = vsyncadd [#allocation4], 0
      %s63 = sshll.u32 [#allocation5], 4
      %s64 = int_to_ptr.vmem [resolvable:$true] %s63
      %s65 = sshll.u32 %s1, 4
      %s66 = int_to_ptr.hbm [resolvable:$true] %s65
      %71 = dma.vmem_to_hbm [thread:$0]  %s64, 256, %s66, [#allocation4], 128, 128, 8
    $region13: #{tpu_custom_call.1} parent=1 // pred_fallthru
      _
    // Predicated region
    $region14: #{tpu_custom_call.1} parent=1 // pred_check
      _
    $region15: #{tpu_custom_call.1} parent=1 // pred_check_branch
      %73 = sbr.rel (0) target = $region17
    $region16: #{tpu_custom_call.1} parent=1 // pred_region
      %75 = dma.done [#allocation4], 256
    $region17: #{tpu_custom_call.1} parent=1 // pred_fallthru
      _
    %76 = vsyncpa [#allocation3], 1
    %77 = vsyncpa [#allocation4], 1

</llo_original>
